<compile_context>
chip_gen: v6e
topology: v6e:2x2x1
jax: 0.10.0
libtpu: 0.0.40
codegen_flags: <defaults>
</compile_context>

<pallas_src>
import functools
from typing import NamedTuple

import jax
import jax.numpy as jnp
from jax.experimental import pallas as pl
from jax.experimental.pallas import tpu as pltpu


def _round_up(x, m):
    return ((x + m - 1) // m) * m


def _pick_tile(n, desired, quantum):
    """Largest tile (multiple of `quantum`, <= desired) keeping pad waste <= ~12.5%."""
    t = max(quantum, (min(desired, _round_up(n, quantum)) // quantum) * quantum)
    while t > quantum and (_round_up(n, t) - n) * 8 > n:
        t = max(quantum, ((t // 2) // quantum) * quantum)
    return t


class GCNPlan(NamedTuple):
    n: int
    f_out: int
    f_pad: int
    tm: int
    tk: int
    n_rows: int
    n_cols: int
    h_resident: bool


def gcn_plan(n, f_out, *, tm=256, tk=512, resident_h_budget=8 << 20):
    """Static tiling / padding plan for a graph of `n` nodes (reused across calls)."""
    f_pad = _round_up(max(f_out, 128), 128)          # lane-dense output width
    tm_eff = _pick_tile(n, tm, 32)                   # int8 sublane quantum = 32
    # v7x has 2 TensorCores: prefer >= 2 row tiles so the "parallel" axis shards.
    while tm_eff > 32 and _round_up(n, tm_eff) // tm_eff < 2:
        tm_eff = max(32, ((tm_eff // 2) // 32) * 32)
    tk_eff = _pick_tile(n, tk, 128)                  # lane / contraction quantum = 128
    n_rows = _round_up(n, tm_eff)
    n_cols = _round_up(n, tk_eff)
    # H is VMEM-resident only if it fits a conservative budget (safe on v7x 64 MiB).
    h_resident = (n_cols * f_pad * 2) <= resident_h_budget
    return GCNPlan(n, f_out, f_pad, tm_eff, tk_eff, n_rows, n_cols, h_resident)


def prepare_adjacency(adj, plan: GCNPlan):
    """Pad + cast the (static) adjacency to int8 ONCE; reuse across layers/iterations."""
    a = jnp.zeros((plan.n_rows, plan.n_cols), jnp.int8)
    return a.at[:plan.n, :plan.n].set(adj.astype(jnp.int8))


def _gcn_kernel(a_ref, h_ref, b_ref, o_ref, *, tk, h_resident):
    k = pl.program_id(1)

    # A arrives as int8 (0/1): upcast on the VPU right before the MXU (exact values).
    a = a_ref[...].astype(jnp.float32).astype(jnp.bfloat16)

    if h_resident:
        # H is fully VMEM-resident; slice the current contraction chunk.
        start = pl.multiple_of(k * tk, tk)
        h = h_ref[pl.ds(start, tk), :]
    else:
        h = h_ref[...]

    partial = jnp.dot(a, h, preferred_element_type=jnp.float32)

    # Accumulate directly into the (VMEM-resident) f32 output block: no scratch,
    # no zero-fill, no final copy.
    @pl.when(k == 0)
    def _():
        o_ref[...] = partial

    @pl.when(k != 0)
    def _():
        o_ref[...] += partial

    @pl.when(k == pl.num_programs(1) - 1)
    def _():
        o_ref[...] = jnp.maximum(o_ref[...] + b_ref[...], 0.0)


def gcn_forward(adj_i8, feat, weight, bias, plan: GCNPlan):
    """adj_i8: prepared [n_rows, n_cols] int8; feat: [N, F_in];
    weight: [F_out, F_in] (nn.Linear layout); bias: [F_out]."""
    n, f_out, f_pad = plan.n, plan.f_out, plan.f_pad
    tm, tk, n_rows, n_cols = plan.tm, plan.tk, plan.n_rows, plan.n_cols

    # Hoist the Linear: H = X @ W.T once in XLA (tiny K = F_in, no in-kernel transpose).
    h = jnp.dot(feat, weight.T, preferred_element_type=jnp.float32)
    h_p = jnp.zeros((n_cols, f_pad), jnp.bfloat16).at[:n, :f_out].set(h.astype(jnp.bfloat16))
    b_p = jnp.zeros((1, f_pad), jnp.float32).at[0, :f_out].set(bias.astype(jnp.float32))

    grid = (n_rows // tm, n_cols // tk)

    if plan.h_resident:
        h_spec = pl.BlockSpec((n_cols, f_pad), lambda i, k: (0, 0))   # fetched once
    else:
        h_spec = pl.BlockSpec((tk, f_pad), lambda i, k: (k, 0))       # tiled fallback

    bytes_h = n_cols * f_pad * 2 * (1 if plan.h_resident else grid[0])
    cost = pl.CostEstimate(
        flops=2 * n_rows * n_cols * f_pad,
        transcendentals=0,
        bytes_accessed=n_rows * n_cols * 1 + bytes_h + f_pad * 4 + n_rows * f_pad * 4,
    )

    kernel = functools.partial(_gcn_kernel, tk=tk, h_resident=plan.h_resident)

    out = pl.pallas_call(
        kernel,
        out_shape=jax.ShapeDtypeStruct((n_rows, f_pad), jnp.float32),
        grid_spec=pltpu.PrefetchScalarGridSpec(
            num_scalar_prefetch=0,
            grid=grid,
            in_specs=[
                pl.BlockSpec((tm, tk), lambda i, k: (i, k)),     # A tile (int8)
                h_spec,                                          # H (resident or tiled)
                pl.BlockSpec((1, f_pad), lambda i, k: (0, 0)),   # bias (resident)
            ],
            out_specs=pl.BlockSpec((tm, f_pad), lambda i, k: (i, 0)),
        ),
        compiler_params=pltpu.CompilerParams(
            dimension_semantics=("parallel", "arbitrary"),
            vmem_limit_bytes=32 << 20,
        ),
        cost_estimate=cost,
    )(adj_i8, h_p, b_p)

    return out[:n, :f_out]


if __name__ == "__main__":
    key = jax.random.PRNGKey(0)
    k_adj, k_feat, k_w, k_b = jax.random.split(key, 4)

    N = 16        # number of graph nodes
    IN_FEATS = 8
    OUT_FEATS = 32

    # Deterministic synthetic graph: random 0/1 adjacency (copy_src + sum over edges).
    adj = (jax.random.uniform(k_adj, (N, N)) > 0.7).astype(jnp.float32)
    feat = jax.random.normal(k_feat, (N, IN_FEATS), dtype=jnp.float32)

    # nn.Linear(in_feats, out_feats)-shaped parameters, deterministic init.
    bound = 1.0 / (IN_FEATS ** 0.5)
    weight = jax.random.uniform(k_w, (OUT_FEATS, IN_FEATS), minval=-bound, maxval=bound)
    bias = jax.random.uniform(k_b, (OUT_FEATS,), minval=-bound, maxval=bound)

    plan = gcn_plan(N, OUT_FEATS)
    adj_i8 = jax.block_until_ready(prepare_adjacency(adj, plan))   # once per graph

    fwd = jax.jit(functools.partial(gcn_forward, plan=plan))
    out = jax.block_until_ready(fwd(adj_i8, feat, weight, bias))
    assert out.shape == (N, OUT_FEATS)

    # Tight check against the kernel's exact math (H rounded to bf16; A @ H exact, A is 0/1).
    h_bf16 = (feat @ weight.T).astype(jnp.bfloat16).astype(jnp.float32)
    ref_exact = jnp.maximum(adj @ h_bf16 + bias, 0.0)
    assert jnp.allclose(out, ref_exact, atol=1e-4, rtol=1e-4)

    # Loose check against the pure-f32 module semantics (copy_src + sum, Linear, ReLU).
    ref_f32 = jnp.maximum((adj @ feat) @ weight.T + bias, 0.0)
    assert jnp.allclose(out, ref_f32, atol=1e-1, rtol=1e-1)

    print("KERNEL_OK")
</pallas_src>

<mosaic_0001>
module attributes {stable_mosaic.version = 11 : i64} {
  func.func @_gcn_kernel(%arg0: i32, %arg1: i32, %arg2: memref<32x128xi8, #tpu.memory_space<vmem>>, %arg3: memref<128x128xbf16, #tpu.memory_space<vmem>>, %arg4: memref<1x128xf32, #tpu.memory_space<vmem>>, %arg5: memref<32x128xf32, #tpu.memory_space<vmem>>) attributes {dimension_semantics = [#tpu.dimension_semantics<parallel>, #tpu.dimension_semantics<arbitrary>], iteration_bounds = array<i64: 1, 1>, scalar_prefetch = 0 : i64, scratch_operands = 0 : i64, tpu.core_type = #tpu.core_type<tc>, window_params = [{transform_indices = @transform_0, window_bounds = array<i64: 32, 128>}, {pipeline_mode = #tpu.pipeline_mode<synchronous>, transform_indices = @transform_1, window_bounds = array<i64: 128, 128>}, {pipeline_mode = #tpu.pipeline_mode<synchronous>, transform_indices = @transform_2, window_bounds = array<i64: 1, 128>}, {transform_indices = @transform_3, window_bounds = array<i64: 32, 128>}]} {
    %c0 = arith.constant 0 : index
    %c0_0 = arith.constant 0 : index
    %0 = vector.load %arg2[%c0, %c0_0] : memref<32x128xi8, #tpu.memory_space<vmem>>, vector<32x128xi8>
    %1 = arith.sitofp %0 : vector<32x128xi8> to vector<32x128xf32>
    %2 = arith.truncf %1 : vector<32x128xf32> to vector<32x128xbf16>
    %c128_i32 = arith.constant 128 : i32
    %3 = arith.muli %arg1, %c128_i32 : i32
    %4 = tpu.assume_multiple %3, 128 : i32
    %5 = arith.index_cast %4 : i32 to index
    %c0_1 = arith.constant 0 : index
    %6 = vector.load %arg3[%5, %c0_1] : memref<128x128xbf16, #tpu.memory_space<vmem>>, vector<128x128xbf16>
    %cst = arith.constant dense<0.000000e+00> : vector<32x128xf32>
    %7 = tpu.matmul %2, %6, %cst {dimension_numbers = #tpu.dot_dimension_numbers<[1], [0], [0], [1], [0, 0, 1, 1], [], []>} : vector<32x128xbf16>, vector<128x128xbf16>, vector<32x128xf32> -> vector<32x128xf32>
    %c0_i32 = arith.constant 0 : i32
    %8 = arith.cmpi eq, %arg1, %c0_i32 : i32
    %9 = arith.extui %8 : i1 to i32
    %c0_i32_2 = arith.constant 0 : i32
    %10 = arith.cmpi ne, %9, %c0_i32_2 : i32
    scf.if %10 {
      %c0_7 = arith.constant 0 : index
      %c0_8 = arith.constant 0 : index
      %17 = vector.load %arg5[%c0_7, %c0_8] : memref<32x128xf32, #tpu.memory_space<vmem>>, vector<32x128xf32>
      tpu.vector_store %arg5[%c0_7, %c0_8], %7 {strides = array<i32>} : memref<32x128xf32, #tpu.memory_space<vmem>>, vector<32x128xf32>,
    } else {
    }
    %c0_i32_3 = arith.constant 0 : i32
    %11 = arith.cmpi ne, %arg1, %c0_i32_3 : i32
    %12 = arith.extui %11 : i1 to i32
    %c0_i32_4 = arith.constant 0 : i32
    %13 = arith.cmpi ne, %12, %c0_i32_4 : i32
    scf.if %13 {
      %c0_7 = arith.constant 0 : index
      %c0_8 = arith.constant 0 : index
      %17 = vector.load %arg5[%c0_7, %c0_8] : memref<32x128xf32, #tpu.memory_space<vmem>>, vector<32x128xf32>
      %18 = arith.addf %17, %7 : vector<32x128xf32>
      %c0_9 = arith.constant 0 : index
      %c0_10 = arith.constant 0 : index
      %19 = vector.load %arg5[%c0_9, %c0_10] : memref<32x128xf32, #tpu.memory_space<vmem>>, vector<32x128xf32>
      tpu.vector_store %arg5[%c0_9, %c0_10], %18 {strides = array<i32>} : memref<32x128xf32, #tpu.memory_space<vmem>>, vector<32x128xf32>,
    } else {
    }
    %c0_i32_5 = arith.constant 0 : i32
    %14 = arith.cmpi eq, %arg1, %c0_i32_5 : i32
    %15 = arith.extui %14 : i1 to i32
    %c0_i32_6 = arith.constant 0 : i32
    %16 = arith.cmpi ne, %15, %c0_i32_6 : i32
    scf.if %16 {
      %c0_7 = arith.constant 0 : index
      %c0_8 = arith.constant 0 : index
      %17 = vector.load %arg5[%c0_7, %c0_8] : memref<32x128xf32, #tpu.memory_space<vmem>>, vector<32x128xf32>
      %c0_9 = arith.constant 0 : index
      %c0_10 = arith.constant 0 : index
      %18 = vector.load %arg4[%c0_9, %c0_10] : memref<1x128xf32, #tpu.memory_space<vmem>>, vector<1x128xf32>
      %19 = vector.broadcast %18 : vector<1x128xf32> to vector<32x128xf32>
      %20 = arith.addf %17, %19 : vector<32x128xf32>
      %cst_11 = arith.constant 0.000000e+00 : f32
      %21 = vector.broadcast %cst_11 : f32 to vector<32x128xf32>
      %22 = arith.maximumf %20, %21 : vector<32x128xf32>
      %c0_12 = arith.constant 0 : index
      %c0_13 = arith.constant 0 : index
      %23 = vector.load %arg5[%c0_12, %c0_13] : memref<32x128xf32, #tpu.memory_space<vmem>>, vector<32x128xf32>
      tpu.vector_store %arg5[%c0_12, %c0_13], %22 {strides = array<i32>} : memref<32x128xf32, #tpu.memory_space<vmem>>, vector<32x128xf32>,
    } else {
    }
    return
  }
  func.func @transform_0(%arg0: i32, %arg1: i32) -> (i32, i32) {
    %c0_i32 = arith.constant 0 : i32
    return %arg0, %arg1 : i32, i32
  }
  func.func @transform_1(%arg0: i32, %arg1: i32) -> (i32, i32) {
    %c0_i32 = arith.constant 0 : i32
    %c0_i32_0 = arith.constant 0 : i32
    %c0_i32_1 = arith.constant 0 : i32
    return %c0_i32, %c0_i32_0 : i32, i32
  }
  func.func @transform_2(%arg0: i32, %arg1: i32) -> (i32, i32) {
    %c0_i32 = arith.constant 0 : i32
    %c0_i32_0 = arith.constant 0 : i32
    %c0_i32_1 = arith.constant 0 : i32
    return %c0_i32, %c0_i32_0 : i32, i32
  }
  func.func @transform_3(%arg0: i32, %arg1: i32) -> (i32, i32) {
    %c0_i32 = arith.constant 0 : i32
    %c0_i32_0 = arith.constant 0 : i32
    return %arg0, %c0_i32 : i32, i32
  }
}

</mosaic_0001>

<llo_original>
// kernel: gcn_forward.1
$region0: #{gcn_forward.1}
  #allocation0 [shape = 'u32[]', space=smem, size = 0x4, offset = 0x4, fixed_abs, tag = 'smem constant byte address 0x4 - core index']
  #allocation1 [shape = 'u32[144,128]{1,0:T(1,128)}', space=vmem, size = 0x12000, scoped, tag = 'internal scratch']
  %s0 = inlined_call_operand.vmem [shape: s8[32,128], index: 0, kind: input, shape index: {}]
  %s1 = inlined_call_operand.vmem [shape: bf16[128,128], index: 1, kind: input, shape index: {}]
  %s2 = inlined_call_operand.vmem [shape: f32[1,128], index: 2, kind: input, shape index: {}]
  %s3 = inlined_call_operand.vmem [shape: f32[32,128], index: 3, kind: output, shape index: {}]
  %s4 = sld [smem:[#allocation0]]
  $region34: #{gcn_forward.1} parent=0
    _
  %s6 = ssub.s32 1, %s4
  %s7 = scalar_select 0, %s6, %s4
  // Predicated region
  $region2: #{gcn_forward.1} parent=0 // pred_check
    _
  $region3: #{gcn_forward.1} parent=0 // pred_check_branch
    %9 = sbr.rel (0) target = $region5
  $region4: #{gcn_forward.1} parent=0 // pred_region
    _
  $region5: #{gcn_forward.1} parent=0 // pred_fallthru
    _
  // Predicated region
  $region6: #{gcn_forward.1} parent=0 // pred_check
    _
  $region7: #{gcn_forward.1} parent=0 // pred_check_branch
    %11 = sbr.rel (0) target = $region9
  $region8: #{gcn_forward.1} parent=0 // pred_region
    _
  $region9: #{gcn_forward.1} parent=0 // pred_fallthru
    _
  // Predicated region
  $region10: #{gcn_forward.1} parent=0 // pred_check
    _
  $region11: #{gcn_forward.1} parent=0 // pred_check_branch
    %13 = sbr.rel (0) target = $region13
  $region12: #{gcn_forward.1} parent=0 // pred_region
    _
  $region13: #{gcn_forward.1} parent=0 // pred_fallthru
    _
  %v15 = vld [vmem:[%s0] sm:$0xff]
  %v16 = vunpack.c.l.s8.bf16 %v15
  %v17 = vunpack.c.h.s8.bf16 %v15
  %s18 = smul.u32 0, 128
  %s19 = sshra.s32 %s18, 3
  %s20 = sand.u32 %s18, 7
  %s21 = smul.addr %s19, 4
  %s22 = scalar_lea.vmem %s1, %s21
  %v23 = vld [vmem:[%s22] sm:$0xf]
  %v24 = vld [vmem:[%s22 + $0x4] sm:$0xf]
  %v25 = vld [vmem:[%s22 + $0x8] sm:$0xf]
  %v26 = vld [vmem:[%s22 + $0xc] sm:$0xf]
  %v27 = vld [vmem:[%s22 + $0x10] sm:$0xf]
  %v28 = vld [vmem:[%s22 + $0x14] sm:$0xf]
  %v29 = vld [vmem:[%s22 + $0x18] sm:$0xf]
  %v30 = vld [vmem:[%s22 + $0x1c] sm:$0xf]
  %v31 = vld [vmem:[%s22 + $0x20] sm:$0xf]
  %v32 = vld [vmem:[%s22 + $0x24] sm:$0xf]
  %v33 = vld [vmem:[%s22 + $0x28] sm:$0xf]
  %v34 = vld [vmem:[%s22 + $0x2c] sm:$0xf]
  %v35 = vld [vmem:[%s22 + $0x30] sm:$0xf]
  %v36 = vld [vmem:[%s22 + $0x34] sm:$0xf]
  %v37 = vld [vmem:[%s22 + $0x38] sm:$0xf]
  %v38 = vld [vmem:[%s22 + $0x3c] sm:$0xf]
  %v55 = vunpack.c.l.b16 %v23
  %v56 = vunpack.c.l.b16 %v24
  %v57 = vunpack.c.l.b16 %v25
  %v58 = vunpack.c.l.b16 %v26
  %v59 = vunpack.c.l.b16 %v27
  %v60 = vunpack.c.l.b16 %v28
  %v61 = vunpack.c.l.b16 %v29
  %v62 = vunpack.c.l.b16 %v30
  %v63 = vunpack.c.l.b16 %v31
  %v64 = vunpack.c.l.b16 %v32
  %v65 = vunpack.c.l.b16 %v33
  %v66 = vunpack.c.l.b16 %v34
  %v67 = vunpack.c.l.b16 %v35
  %v68 = vunpack.c.l.b16 %v36
  %v69 = vunpack.c.l.b16 %v37
  %v70 = vunpack.c.l.b16 %v38
  %v71 = vpack.c.b16 %v56, %v55
  %v72 = vpack.c.b16 %v58, %v57
  %v73 = vpack.c.b16 %v60, %v59
  %v74 = vpack.c.b16 %v62, %v61
  %v75 = vpack.c.b16 %v64, %v63
  %v76 = vpack.c.b16 %v66, %v65
  %v77 = vpack.c.b16 %v68, %v67
  %v78 = vpack.c.b16 %v70, %v69
  %87 = vmatprep.subr.bf16.mxu0 0
  %88 = vmatpush1.bf16.msra.mxu0 %v78
  %89 = vmatprep.subr.bf16.mxu0 0
  %90 = vmatpush1.bf16.msra.mxu0 %v77
  %91 = vmatprep.subr.bf16.mxu0 0
  %92 = vmatpush1.bf16.msra.mxu0 %v76
  %93 = vmatprep.subr.bf16.mxu0 0
  %94 = vmatpush1.bf16.msra.mxu0 %v75
  %95 = vmatprep.subr.bf16.mxu0 0
  %96 = vmatpush1.bf16.msra.mxu0 %v74
  %97 = vmatprep.subr.bf16.mxu0 0
  %98 = vmatpush1.bf16.msra.mxu0 %v73
  %99 = vmatprep.subr.bf16.mxu0 0
  %100 = vmatpush1.bf16.msra.mxu0 %v72
  %101 = vmatprep.subr.bf16.mxu0 0
  %102 = vmatpush1.bf16.msra.mxu0 %v71
  %103 = vmatprep.subr.bf16.mxu0 0
  %104 = vmatpush2.bf16.msra.mxu0 0
  %105 = vmatprep.subr.bf16.mxu0 0
  %106 = vmatpush2.bf16.msra.mxu0 0
  %107 = vmatprep.subr.bf16.mxu0 0
  %108 = vmatpush2.bf16.msra.mxu0 0
  %109 = vmatprep.subr.bf16.mxu0 0
  %110 = vmatpush2.bf16.msra.mxu0 0
  %111 = vmatprep.subr.bf16.mxu0 0
  %112 = vmatpush2.bf16.msra.mxu0 0
  %113 = vmatprep.subr.bf16.mxu0 0
  %114 = vmatpush2.bf16.msra.mxu0 0
  %115 = vmatprep.subr.bf16.mxu0 0
  %116 = vmatpush2.bf16.msra.mxu0 0
  %117 = vmatprep.subr.bf16.mxu0 0
  %118 = vmatpush2.bf16.msra.mxu0 0
  %119 = vmatprep.mubr.bf16.mxu0 0
  %120 = vmatmul.mubr.bf16.gmra.mxu0 %v16
  %v121 = vpop.f32.mrf.mxu0
  %v122 = vadd.f32 0.0, %v121
  %v123 = vpop.f32.mrf.mxu0
  %v124 = vpop.f32.mrf.mxu0
  %v125 = vadd.f32 0.0, %v124
  %v126 = vpop.f32.mrf.mxu0
  %127 = vmatprep.mubr.bf16.mxu0 0
  %128 = vmatmul.mubr.bf16.gmra.mxu0 %v17
  %v129 = vpop.f32.mrf.mxu0
  %v130 = vadd.f32 0.0, %v129
  %v131 = vpop.f32.mrf.mxu0
  %v132 = vpop.f32.mrf.mxu0
  %v133 = vadd.f32 0.0, %v132
  %v134 = vpop.f32.mrf.mxu0
  %135 = vdwg.mxu0
  %p136 = scmp.eq.s32.totalorder 0, 0
  // Predicated region
  $region14: #{gcn_forward.1} parent=0 // pred_check
    %p137 = pneg %p136
  $region15: #{gcn_forward.1} parent=0 // pred_check_branch
    %139 = sbr.rel (%p137) target = $region17
  $region16: #{gcn_forward.1} parent=0 // pred_region
    %140 = vst [vmem:[%s3] sm:$0xff] %v122
    %141 = vst [vmem:[%s3 + $0x8] sm:$0xff] %v125
    %142 = vst [vmem:[%s3 + $0x10] sm:$0xff] %v130
    %143 = vst [vmem:[%s3 + $0x18] sm:$0xff] %v133
  $region17: #{gcn_forward.1} parent=0 // pred_fallthru
    _
  %p144 = scmp.ne.s32.totalorder 0, 0
  // Predicated region
  $region18: #{gcn_forward.1} parent=0 // pred_check
    %p145 = pneg %p144
  $region19: #{gcn_forward.1} parent=0 // pred_check_branch
    %147 = sbr.rel (%p145) target = $region21
  $region20: #{gcn_forward.1} parent=0 // pred_region
    %v148 = vld [vmem:[%s3] sm:$0xff]
    %v149 = vld [vmem:[%s3 + $0x8] sm:$0xff]
    %v150 = vld [vmem:[%s3 + $0x10] sm:$0xff]
    %v151 = vld [vmem:[%s3 + $0x18] sm:$0xff]
    %v152 = vadd.f32 %v148, %v122
    %v153 = vadd.f32 %v149, %v125
    %v154 = vadd.f32 %v150, %v130
    %v155 = vadd.f32 %v151, %v133
    %156 = vst [vmem:[%s3] sm:$0xff] %v152
    %157 = vst [vmem:[%s3 + $0x8] sm:$0xff] %v153
    %158 = vst [vmem:[%s3 + $0x10] sm:$0xff] %v154
    %159 = vst [vmem:[%s3 + $0x18] sm:$0xff] %v155
  $region21: #{gcn_forward.1} parent=0 // pred_fallthru
    _
  // Predicated region
  $region22: #{gcn_forward.1} parent=0 // pred_check
    %p160 = pneg %p136
  $region23: #{gcn_forward.1} parent=0 // pred_check_branch
    %162 = sbr.rel (%p160) target = $region25
  $region24: #{gcn_forward.1} parent=0 // pred_region
    %v163 = vld [vmem:[%s3] sm:$0xff]
    %v164 = vld [vmem:[%s3 + $0x8] sm:$0xff]
    %v165 = vld [vmem:[%s3 + $0x10] sm:$0xff]
    %v166 = vld [vmem:[%s3 + $0x18] sm:$0xff]
    %v167 = vld [vmem:[%s2] sm:$0x1]
    %v169 = vlaneseq
    %v170 = vshrl.u32 %v169, 7
    %v171 = vsub.s32 0, %v170
    %v172 = vrot.slane %v167, %v171
    %v174 = vadd.f32 %v163, %v172
    %v175 = vadd.f32 %v164, %v172
    %v176 = vadd.f32 %v165, %v172
    %v177 = vadd.f32 %v166, %v172
    %v178 = vmax.f32 %v174, 0.0
    %v179 = vmax.f32 %v175, 0.0
    %v180 = vmax.f32 %v176, 0.0
    %v181 = vmax.f32 %v177, 0.0
    %182 = vst [vmem:[%s3] sm:$0xff] %v178
    %183 = vst [vmem:[%s3 + $0x8] sm:$0xff] %v179
    %184 = vst [vmem:[%s3 + $0x10] sm:$0xff] %v180
    %185 = vst [vmem:[%s3 + $0x18] sm:$0xff] %v181
  $region25: #{gcn_forward.1} parent=0 // pred_fallthru
    _
  // Predicated region
  $region26: #{gcn_forward.1} parent=0 // pred_check
    _
  $region27: #{gcn_forward.1} parent=0 // pred_check_branch
    %187 = sbr.rel (0) target = $region29
  $region28: #{gcn_forward.1} parent=0 // pred_region
    _
  $region29: #{gcn_forward.1} parent=0 // pred_fallthru
    _
  // Predicated region
  $region30: #{gcn_forward.1} parent=0 // pred_check
    _
  $region31: #{gcn_forward.1} parent=0 // pred_check_branch
    %189 = sbr.rel (0) target = $region33
  $region32: #{gcn_forward.1} parent=0 // pred_region
    _
  $region33: #{gcn_forward.1} parent=0 // pred_fallthru
    _

</llo_original>
